<compile_context>
chip_gen: v7x
topology: tpu7x:2x2x1
jax: 0.10.0
libtpu: 0.0.40
codegen_flags: <defaults>
</compile_context>

<pallas_src>
import functools

import jax
import jax.numpy as jnp
from jax.experimental import pallas as pl
from jax.experimental.pallas import tpu as pltpu

FOCAL_ALPHA = 0.25  # self.focal_alpha
# gamma = 2 (hard-coded as a squared modulating factor below, module default)


# --------------------------------------------------------------------------
# Main streaming kernel: sigmoid focal loss + cardinality counts, per image.
# Grid = (B, ceil(Q / tr)).  Outputs one lane-dense (1, 8, 128) block per
# image: lane 0 = un-normalized focal sum, lane 1 = predicted box count.
# --------------------------------------------------------------------------
def _cls_card_kernel(hit_ref,      # VMEM (1, tr, 1)  f32 matched-row mask
                     logits_ref,   # VMEM (1, tr, C)  focal logits tile
                     plogits_ref,  # VMEM (1, tr, K)  cardinality logits tile
                     out_ref,      # VMEM (1, 8, 128) per-image result block
                     facc,         # VMEM (tr, 1) f32 focal row accumulator
                     cacc,         # VMEM (tr, 1) f32 cardinality row accumulator
                     *, q_total):
    q = pl.program_id(1)
    nq = pl.num_programs(1)
    tr = logits_ref.shape[1]
    K = plogits_ref.shape[2]

    @pl.when(q == 0)
    def _init():
        facc[...] = jnp.zeros_like(facc)
        cacc[...] = jnp.zeros_like(cacc)

    # Row validity (handles Q not divisible by tr; padded rows may hold
    # garbage, jnp.where *selects* 0 so NaN/Inf garbage cannot propagate).
    row_id = jax.lax.broadcasted_iota(jnp.int32, (tr, 1), 0) + q * tr
    valid = row_id < q_total

    # ---------------- loss_labels: sigmoid focal loss ----------------------
    # target_classes_onehot[b, src_idx[b, m], :] = 1 -> the target is constant
    # per row, so compute the t=0 and t=1 losses (sharing exp/log/recip),
    # reduce over C, and blend the two row sums with the precomputed mask.
    x = logits_ref[0].astype(jnp.float32)                 # [tr, C]
    e = jnp.exp(-jnp.abs(x))                              # shared EUP push
    log_term = jnp.log(1.0 + e)                           # BCE log term
    inv = pl.reciprocal(1.0 + e, approx=True)             # EUP, off the VALU
    prob = jnp.where(x >= 0.0, inv, e * inv)              # sigmoid(x)
    ce0 = jnp.maximum(x, 0.0) + log_term                  # BCE(x, t=0)
    ce1 = ce0 - x                                         # BCE(x, t=1)
    loss0 = (1.0 - FOCAL_ALPHA) * (ce0 * (prob * prob))   # gamma = 2
    omp = 1.0 - prob
    loss1 = FOCAL_ALPHA * (ce1 * (omp * omp))
    sum0 = jnp.sum(loss0, axis=1, keepdims=True)          # [tr, 1]
    sum1 = jnp.sum(loss1, axis=1, keepdims=True)          # [tr, 1]
    hit = hit_ref[0].astype(jnp.float32)                  # [tr, 1]
    row = sum0 + hit * (sum1 - sum0)
    facc[...] += jnp.where(valid, row, 0.0)

    # ---------------- loss_cardinality --------------------------------------
    pk = plogits_ref[0].astype(jnp.float32)               # [tr, K]
    k_iota = jax.lax.broadcasted_iota(jnp.int32, (tr, K), 1)
    max_rest = jnp.max(jnp.where(k_iota < (K - 1), pk, -jnp.inf),
                       axis=1, keepdims=True)             # max over first K-1
    last_val = pk[:, K - 1:K]                             # static lane slice
    # argmax(-1) != K-1  <=>  max over first K-1 classes >= last class
    nno = (max_rest >= last_val).astype(jnp.float32)      # [tr, 1]
    cacc[...] += jnp.where(valid, nno, 0.0)

    # ---------------- per-image finalize ------------------------------------
    @pl.when(q == nq - 1)
    def _finalize():
        fsum = jnp.sum(facc[...])
        csum = jnp.sum(cacc[...])
        lane = jax.lax.broadcasted_iota(jnp.int32, (1, 8, 128), 2)
        out_ref[...] = jnp.where(lane == 0, fsum,
                                 jnp.where(lane == 1, csum, 0.0))


# --------------------------------------------------------------------------
# Tiny single-step kernel for the matched-box losses (L1 + GIoU) on the
# wrapper-gathered [B*M, 4] boxes.
# --------------------------------------------------------------------------
def _box_loss_kernel(src_ref, tgt_ref, out_ref):
    sb = src_ref[...].astype(jnp.float32)                 # [N, 4]
    tb = tgt_ref[...].astype(jnp.float32)
    l1_sum = jnp.sum(jnp.abs(sb - tb))

    def _cxcywh_to_xyxy(bx):
        cx, cy, w, h = bx[:, 0:1], bx[:, 1:2], bx[:, 2:3], bx[:, 3:4]
        return cx - 0.5 * w, cy - 0.5 * h, cx + 0.5 * w, cy + 0.5 * h

    sx1, sy1, sx2, sy2 = _cxcywh_to_xyxy(sb)
    tx1, ty1, tx2, ty2 = _cxcywh_to_xyxy(tb)
    area_s = (sx2 - sx1) * (sy2 - sy1)
    area_t = (tx2 - tx1) * (ty2 - ty1)
    iw = jnp.maximum(jnp.minimum(sx2, tx2) - jnp.maximum(sx1, tx1), 0.0)
    ih = jnp.maximum(jnp.minimum(sy2, ty2) - jnp.maximum(sy1, ty1), 0.0)
    inter = iw * ih
    union = area_s + area_t - inter
    iou = inter / union          # matches torchvision: assumes valid boxes
    ew = jnp.maximum(sx2, tx2) - jnp.minimum(sx1, tx1)
    eh = jnp.maximum(sy2, ty2) - jnp.minimum(sy1, ty1)
    enc = ew * eh
    giou = iou - (enc - union) / enc
    out_ref[0] = l1_sum
    out_ref[1] = jnp.sum(1.0 - giou)


def _pick_row_tile(q, c, k, itemsize):
    """Row-tile from a VMEM working-set budget (~12 MiB of [tr, C] f32
    temporaries + double-buffered input tiles) so the kernel stays within the
    scoped VMEM limit on every generation (v7x has only 64 MiB physical)."""
    per_row = (c + k) * (5 * 4 + 2 * 2 * itemsize) + 1024  # temps + 2x2 buffers
    budget = 12 * 1024 * 1024
    tr = (budget // max(per_row, 1)) // 8 * 8
    tr = int(max(8, min(1024, tr)))
    return q if q <= tr else tr


@jax.jit
def decola_criterion_losses(pred_logits_loss, pred_logits, pred_boxes,
                            tgt_boxes, tgt_len, src_idx, tgt_idx, num_boxes):
    """Main-output branch of Set_DECOLA_Criterion.forward (enc_only=False,
    losses=['labels','boxes','cardinality'], loss_per_image=False).

    indices (src_idx, tgt_idx) are supplied externally because the Hungarian
    matcher / stage assigners cannot be expressed in Pallas."""
    B, Q, C = pred_logits_loss.shape
    K = pred_logits.shape[-1]
    M = src_idx.shape[1]

    src_idx = src_idx.astype(jnp.int32)
    tgt_idx = tgt_idx.astype(jnp.int32)

    # Precomputed per-row match mask: hit[b, q] = 1 iff query q is matched.
    b_idx = jnp.arange(B, dtype=jnp.int32)[:, None]
    hit = jnp.zeros((B, Q), jnp.float32).at[b_idx, src_idx].set(1.0)
    hit = hit[..., None]                                   # [B, Q, 1]

    tr = _pick_row_tile(Q, C, K, pred_logits_loss.dtype.itemsize)
    nq = pl.cdiv(Q, tr)

    grid_spec = pltpu.PrefetchScalarGridSpec(
        num_scalar_prefetch=0,
        grid=(B, nq),
        in_specs=[
            pl.BlockSpec((1, tr, 1), lambda b, q: (b, q, 0)),   # match mask
            pl.BlockSpec((1, tr, C), lambda b, q: (b, q, 0)),   # focal logits
            pl.BlockSpec((1, tr, K), lambda b, q: (b, q, 0)),   # card logits
        ],
        out_specs=pl.BlockSpec((1, 8, 128), lambda b, q: (b, 0, 0)),
        scratch_shapes=[
            pltpu.VMEM((tr, 1), jnp.float32),    # focal row accumulator
            pltpu.VMEM((tr, 1), jnp.float32),    # cardinality row accumulator
        ],
    )

    out = pl.pallas_call(
        functools.partial(_cls_card_kernel, q_total=Q),
        out_shape=jax.ShapeDtypeStruct((B, 8, 128), jnp.float32),
        grid_spec=grid_spec,
        compiler_params=pltpu.CompilerParams(
            dimension_semantics=("parallel", "arbitrary"),
            vmem_limit_bytes=48 * 1024 * 1024),
    )(hit, pred_logits_loss, pred_logits)

    focal_sum = jnp.sum(out[:, 0, 0])                      # sum over all b,q,c
    card_pred = out[:, 0, 1]                               # per-image counts

    # Matched-box gather (O(B*M*4)) in the wrapper; box losses in a tiny
    # single-step Pallas kernel on the gathered boxes.
    src_b = jnp.take_along_axis(pred_boxes, src_idx[..., None], axis=1)
    tgt_b = jnp.take_along_axis(tgt_boxes, tgt_idx[..., None], axis=1)
    src_b = src_b.reshape(B * M, 4)
    tgt_b = tgt_b.reshape(B * M, 4)

    box_out = pl.pallas_call(
        _box_loss_kernel,
        out_shape=jax.ShapeDtypeStruct((2,), jnp.float32),
        grid_spec=pltpu.PrefetchScalarGridSpec(
            num_scalar_prefetch=0,
            grid=(1,),
            in_specs=[pl.BlockSpec((B * M, 4), lambda i: (0, 0)),
                      pl.BlockSpec((B * M, 4), lambda i: (0, 0))],
            out_specs=pl.BlockSpec(memory_space=pltpu.MemorySpace.SMEM),
        ),
    )(src_b, tgt_b)

    num_boxes_f = jnp.asarray(num_boxes, jnp.float32)
    # loss.mean(1).sum() / num_boxes * Q  ==  sum(loss) / num_boxes
    loss_ce = focal_sum / num_boxes_f
    loss_bbox = box_out[0] / num_boxes_f
    loss_giou = box_out[1] / num_boxes_f
    card_err = jnp.mean(jnp.abs(card_pred - tgt_len.astype(jnp.float32)))
    return {'loss_ce': loss_ce, 'loss_bbox': loss_bbox,
            'loss_giou': loss_giou, 'cardinality_error': card_err}


def set_decola_criterion_forward(outputs, targets, indices):
    """Wrapper mirroring Set_DECOLA_Criterion.forward for the main outputs.

    outputs: dict with 'pred_logits_loss' [B,Q,C], 'pred_logits' [B,Q,K],
             'pred_boxes' [B,Q,4]
    targets: dict with 'labels' [B,T] int32, 'boxes' [B,T,4]
    indices: tuple (src_idx [B,M], tgt_idx [B,M]) int32
    """
    # TODO(synk): Hungarian matcher / DECOLA_Stage{1,2}Assigner, the
    # aux_outputs / enc_outputs loops (Python dict plumbing re-calling the same
    # losses), loss_masks, the empty-match early return, and the distributed
    # all_reduce on num_boxes are not ported; the kernels cover the loss math
    # for the main outputs.
    B, T = targets['labels'].shape
    tgt_len = jnp.full((B,), float(T), jnp.float32)
    num_boxes = jnp.maximum(jnp.sum(tgt_len), 1.0)
    src_idx, tgt_idx = indices
    return decola_criterion_losses(
        outputs['pred_logits_loss'], outputs['pred_logits'],
        outputs['pred_boxes'], targets['boxes'],
        tgt_len, src_idx, tgt_idx, num_boxes)


# ------------------------- pure-JAX reference -------------------------------
def _reference_losses(pred_logits_loss, pred_logits, pred_boxes,
                      tgt_boxes, tgt_len, src_idx, tgt_idx, num_boxes):
    B, Q, C = pred_logits_loss.shape
    K = pred_logits.shape[-1]
    onehot = jnp.zeros_like(pred_logits_loss)
    for b in range(B):
        onehot = onehot.at[b, src_idx[b]].set(1.0)
    x = pred_logits_loss
    prob = jax.nn.sigmoid(x)
    ce = jnp.maximum(x, 0) - x * onehot + jnp.log1p(jnp.exp(-jnp.abs(x)))
    p_t = prob * onehot + (1 - prob) * (1 - onehot)
    loss = ce * (1 - p_t) ** 2
    a_t = FOCAL_ALPHA * onehot + (1 - FOCAL_ALPHA) * (1 - onehot)
    loss = a_t * loss
    loss_ce = loss.mean(1).sum() / num_boxes * Q

    src_b = jnp.concatenate([pred_boxes[b, src_idx[b]] for b in range(B)], 0)
    tgt_b = jnp.concatenate([tgt_boxes[b, tgt_idx[b]] for b in range(B)], 0)
    loss_bbox = jnp.abs(src_b - tgt_b).sum() / num_boxes

    def xyxy(bx):
        cx, cy, w, h = bx[:, 0], bx[:, 1], bx[:, 2], bx[:, 3]
        return jnp.stack([cx - w / 2, cy - h / 2, cx + w / 2, cy + h / 2], -1)

    s, t = xyxy(src_b), xyxy(tgt_b)
    area_s = (s[:, 2] - s[:, 0]) * (s[:, 3] - s[:, 1])
    area_t = (t[:, 2] - t[:, 0]) * (t[:, 3] - t[:, 1])
    iw = jnp.clip(jnp.minimum(s[:, 2], t[:, 2]) - jnp.maximum(s[:, 0], t[:, 0]), 0)
    ih = jnp.clip(jnp.minimum(s[:, 3], t[:, 3]) - jnp.maximum(s[:, 1], t[:, 1]), 0)
    inter = iw * ih
    union = area_s + area_t - inter
    iou = inter / union
    ew = jnp.maximum(s[:, 2], t[:, 2]) - jnp.minimum(s[:, 0], t[:, 0])
    eh = jnp.maximum(s[:, 3], t[:, 3]) - jnp.minimum(s[:, 1], t[:, 1])
    enc = ew * eh
    giou = iou - (enc - union) / enc
    loss_giou = (1 - giou).sum() / num_boxes

    card_pred = (jnp.argmax(pred_logits, -1) != K - 1).sum(1).astype(jnp.float32)
    card_err = jnp.abs(card_pred - tgt_len).mean()
    return {'loss_ce': loss_ce, 'loss_bbox': loss_bbox,
            'loss_giou': loss_giou, 'cardinality_error': card_err}


if __name__ == "__main__":
    key = jax.random.PRNGKey(0)
    B, Q, C, K, M = 2, 16, 8, 8, 4   # batch, queries, prompted dim, classes+1, tgts/img
    T = M
    ks = jax.random.split(key, 8)

    pred_logits_loss = jax.random.normal(ks[0], (B, Q, C), jnp.float32)
    pred_logits = jax.random.normal(ks[1], (B, Q, K), jnp.float32)
    pred_boxes = jnp.concatenate(
        [0.2 + 0.6 * jax.random.uniform(ks[2], (B, Q, 2)),
         0.05 + 0.3 * jax.random.uniform(ks[3], (B, Q, 2))], axis=-1)
    tgt_boxes = jnp.concatenate(
        [0.2 + 0.6 * jax.random.uniform(ks[4], (B, T, 2)),
         0.05 + 0.3 * jax.random.uniform(ks[5], (B, T, 2))], axis=-1)
    tgt_labels = jax.random.randint(ks[6], (B, T), 0, K - 1)

    # deterministic matching (stands in for the Hungarian matcher)
    src_idx = jnp.stack([jax.random.permutation(jax.random.fold_in(ks[7], b), Q)[:M]
                         for b in range(B)]).astype(jnp.int32)
    tgt_idx = jnp.stack([jax.random.permutation(jax.random.fold_in(ks[7], 100 + b), T)
                         for b in range(B)]).astype(jnp.int32)

    outputs = {'pred_logits_loss': pred_logits_loss,
               'pred_logits': pred_logits,
               'pred_boxes': pred_boxes}
    targets = {'labels': tgt_labels, 'boxes': tgt_boxes}

    losses = set_decola_criterion_forward(outputs, targets, (src_idx, tgt_idx))
    losses = jax.tree_util.tree_map(jax.block_until_ready, losses)

    tgt_len = jnp.full((B,), float(T), jnp.float32)
    num_boxes = jnp.maximum(jnp.sum(tgt_len), 1.0)
    ref = _reference_losses(pred_logits_loss, pred_logits, pred_boxes,
                            tgt_boxes, tgt_len, src_idx, tgt_idx, num_boxes)
    for name in losses:
        got, want = float(losses[name]), float(ref[name])
        assert abs(got - want) <= 2e-3 * max(1.0, abs(want)), (name, got, want)

    print("KERNEL_OK")
</pallas_src>

<mosaic_0001>
module attributes {stable_mosaic.version = 11 : i64} {
  func.func @_cls_card_kernel(%arg0: i32, %arg1: i32, %arg2: memref<1x16x1xf32, #tpu.memory_space<vmem>>, %arg3: memref<1x16x8xf32, #tpu.memory_space<vmem>>, %arg4: memref<1x16x8xf32, #tpu.memory_space<vmem>>, %arg5: memref<1x8x128xf32, #tpu.memory_space<vmem>>, %arg6: memref<16x1xf32, #tpu.memory_space<vmem>>, %arg7: memref<16x1xf32, #tpu.memory_space<vmem>>) attributes {dimension_semantics = [#tpu.dimension_semantics<parallel>, #tpu.dimension_semantics<arbitrary>], iteration_bounds = array<i64: 2, 1>, scalar_prefetch = 0 : i64, scratch_operands = 2 : i64, tpu.core_type = #tpu.core_type<tc>, window_params = [{transform_indices = @transform_0, window_bounds = array<i64: 1, 16, 1>}, {transform_indices = @transform_1, window_bounds = array<i64: 1, 16, 8>}, {transform_indices = @transform_2, window_bounds = array<i64: 1, 16, 8>}, {transform_indices = @transform_3, window_bounds = array<i64: 1, 8, 128>}]} {
    %c0_i32 = arith.constant 0 : i32
    %0 = arith.cmpi eq, %arg1, %c0_i32 : i32
    %1 = arith.extui %0 : i1 to i32
    %c0_i32_0 = arith.constant 0 : i32
    %2 = arith.cmpi ne, %1, %c0_i32_0 : i32
    scf.if %2 {
      %cst_33 = arith.constant 0.000000e+00 : f32
      %74 = vector.broadcast %cst_33 : f32 to vector<16x1xf32>
      %c0_34 = arith.constant 0 : index
      %c0_35 = arith.constant 0 : index
      %75 = vector.load %arg6[%c0_34, %c0_35] : memref<16x1xf32, #tpu.memory_space<vmem>>, vector<16x1xf32>
      tpu.vector_store %arg6[%c0_34, %c0_35], %74 {strides = array<i32>} : memref<16x1xf32, #tpu.memory_space<vmem>>, vector<16x1xf32>,
      %cst_36 = arith.constant 0.000000e+00 : f32
      %76 = vector.broadcast %cst_36 : f32 to vector<16x1xf32>
      %c0_37 = arith.constant 0 : index
      %c0_38 = arith.constant 0 : index
      %77 = vector.load %arg7[%c0_37, %c0_38] : memref<16x1xf32, #tpu.memory_space<vmem>>, vector<16x1xf32>
      tpu.vector_store %arg7[%c0_37, %c0_38], %76 {strides = array<i32>} : memref<16x1xf32, #tpu.memory_space<vmem>>, vector<16x1xf32>,
    } else {
    }
    %3 = tpu.iota {dimensions = array<i32: 0>} : vector<16x1xi32>
    %c16_i32 = arith.constant 16 : i32
    %4 = arith.muli %arg1, %c16_i32 : i32
    %5 = vector.broadcast %4 : i32 to vector<16x1xi32>
    %6 = arith.addi %3, %5 : vector<16x1xi32>
    %c16_i32_1 = arith.constant 16 : i32
    %7 = vector.broadcast %c16_i32_1 : i32 to vector<16x1xi32>
    %8 = arith.cmpi slt, %6, %7 : vector<16x1xi32>
    %c0 = arith.constant 0 : index
    %c0_2 = arith.constant 0 : index
    %c0_3 = arith.constant 0 : index
    %9 = vector.load %arg3[%c0, %c0_2, %c0_3] : memref<1x16x8xf32, #tpu.memory_space<vmem>>, vector<1x16x8xf32>
    %10 = vector.shape_cast %9 : vector<1x16x8xf32> to vector<16x8xf32>
    %11 = math.absf %10 : vector<16x8xf32>
    %cst = arith.constant 0.000000e+00 : f32
    %12 = vector.broadcast %cst : f32 to vector<16x8xf32>
    %13 = arith.subf %12, %11 : vector<16x8xf32>
    %14 = math.exp %13 : vector<16x8xf32>
    %cst_4 = arith.constant 1.000000e+00 : f32
    %15 = vector.broadcast %cst_4 : f32 to vector<16x8xf32>
    %16 = arith.addf %15, %14 : vector<16x8xf32>
    %17 = math.log %16 : vector<16x8xf32>
    %cst_5 = arith.constant 1.000000e+00 : f32
    %18 = vector.broadcast %cst_5 : f32 to vector<16x8xf32>
    %19 = arith.addf %18, %14 : vector<16x8xf32>
    %20 = tpu.reciprocal %19 {approx = true} : vector<16x8xf32> -> vector<16x8xf32>
    %cst_6 = arith.constant 0.000000e+00 : f32
    %21 = vector.broadcast %cst_6 : f32 to vector<16x8xf32>
    %22 = arith.cmpf oge, %10, %21 : vector<16x8xf32>
    %23 = arith.mulf %14, %20 : vector<16x8xf32>
    %24 = arith.select %22, %20, %23 : vector<16x8xi1>, vector<16x8xf32>
    %cst_7 = arith.constant 0.000000e+00 : f32
    %25 = vector.broadcast %cst_7 : f32 to vector<16x8xf32>
    %26 = arith.maximumf %10, %25 : vector<16x8xf32>
    %27 = arith.addf %26, %17 : vector<16x8xf32>
    %28 = arith.subf %27, %10 : vector<16x8xf32>
    %29 = arith.mulf %24, %24 : vector<16x8xf32>
    %30 = arith.mulf %27, %29 : vector<16x8xf32>
    %cst_8 = arith.constant 7.500000e-01 : f32
    %31 = vector.broadcast %cst_8 : f32 to vector<16x8xf32>
    %32 = arith.mulf %31, %30 : vector<16x8xf32>
    %cst_9 = arith.constant 1.000000e+00 : f32
    %33 = vector.broadcast %cst_9 : f32 to vector<16x8xf32>
    %34 = arith.subf %33, %24 : vector<16x8xf32>
    %35 = arith.mulf %34, %34 : vector<16x8xf32>
    %36 = arith.mulf %28, %35 : vector<16x8xf32>
    %cst_10 = arith.constant 2.500000e-01 : f32
    %37 = vector.broadcast %cst_10 : f32 to vector<16x8xf32>
    %38 = arith.mulf %37, %36 : vector<16x8xf32>
    %cst_11 = arith.constant dense<0.000000e+00> : vector<16xf32>
    %39 = vector.multi_reduction <add>, %32, %cst_11 [1] : vector<16x8xf32> to vector<16xf32>
    %40 = vector.shape_cast %39 : vector<16xf32> to vector<16x1xf32>
    %cst_12 = arith.constant dense<0.000000e+00> : vector<16xf32>
    %41 = vector.multi_reduction <add>, %38, %cst_12 [1] : vector<16x8xf32> to vector<16xf32>
    %42 = vector.shape_cast %41 : vector<16xf32> to vector<16x1xf32>
    %c0_13 = arith.constant 0 : index
    %c0_14 = arith.constant 0 : index
    %c0_15 = arith.constant 0 : index
    %43 = vector.load %arg2[%c0_13, %c0_14, %c0_15] : memref<1x16x1xf32, #tpu.memory_space<vmem>>, vector<1x16x1xf32>
    %44 = vector.shape_cast %43 : vector<1x16x1xf32> to vector<16x1xf32>
    %45 = arith.subf %42, %40 : vector<16x1xf32>
    %46 = arith.mulf %44, %45 : vector<16x1xf32>
    %47 = arith.addf %40, %46 : vector<16x1xf32>
    %c0_16 = arith.constant 0 : index
    %c0_17 = arith.constant 0 : index
    %48 = vector.load %arg6[%c0_16, %c0_17] : memref<16x1xf32, #tpu.memory_space<vmem>>, vector<16x1xf32>
    %cst_18 = arith.constant 0.000000e+00 : f32
    %49 = vector.broadcast %cst_18 : f32 to vector<16x1xf32>
    %50 = arith.select %8, %47, %49 : vector<16x1xi1>, vector<16x1xf32>
    %51 = arith.addf %48, %50 : vector<16x1xf32>
    %c0_19 = arith.constant 0 : index
    %c0_20 = arith.constant 0 : index
    %52 = vector.load %arg6[%c0_19, %c0_20] : memref<16x1xf32, #tpu.memory_space<vmem>>, vector<16x1xf32>
    tpu.vector_store %arg6[%c0_19, %c0_20], %51 {strides = array<i32>} : memref<16x1xf32, #tpu.memory_space<vmem>>, vector<16x1xf32>,
    %c0_21 = arith.constant 0 : index
    %c0_22 = arith.constant 0 : index
    %c0_23 = arith.constant 0 : index
    %53 = vector.load %arg4[%c0_21, %c0_22, %c0_23] : memref<1x16x8xf32, #tpu.memory_space<vmem>>, vector<1x16x8xf32>
    %54 = vector.shape_cast %53 : vector<1x16x8xf32> to vector<16x8xf32>
    %55 = tpu.iota {dimensions = array<i32: 1>} : vector<16x8xi32>
    %c7_i32 = arith.constant 7 : i32
    %56 = vector.broadcast %c7_i32 : i32 to vector<16x8xi32>
    %57 = arith.cmpi slt, %55, %56 : vector<16x8xi32>
    %cst_24 = arith.constant 0xFF800000 : f32
    %58 = vector.broadcast %cst_24 : f32 to vector<16x8xf32>
    %59 = arith.select %57, %54, %58 : vector<16x8xi1>, vector<16x8xf32>
    %cst_25 = arith.constant dense<0xFF800000> : vector<16xf32>
    %60 = vector.multi_reduction <maximumf>, %59, %cst_25 [1] : vector<16x8xf32> to vector<16xf32>
    %61 = vector.shape_cast %60 : vector<16xf32> to vector<16x1xf32>
    %62 = vector.extract_strided_slice %54 {offsets = [0, 7], sizes = [16, 1], strides = [1, 1]} : vector<16x8xf32> to vector<16x1xf32>
    %63 = arith.cmpf oge, %61, %62 : vector<16x1xf32>
    %64 = arith.extui %63 : vector<16x1xi1> to vector<16x1xi32>
    %65 = arith.sitofp %64 : vector<16x1xi32> to vector<16x1xf32>
    %c0_26 = arith.constant 0 : index
    %c0_27 = arith.constant 0 : index
    %66 = vector.load %arg7[%c0_26, %c0_27] : memref<16x1xf32, #tpu.memory_space<vmem>>, vector<16x1xf32>
    %cst_28 = arith.constant 0.000000e+00 : f32
    %67 = vector.broadcast %cst_28 : f32 to vector<16x1xf32>
    %68 = arith.select %8, %65, %67 : vector<16x1xi1>, vector<16x1xf32>
    %69 = arith.addf %66, %68 : vector<16x1xf32>
    %c0_29 = arith.constant 0 : index
    %c0_30 = arith.constant 0 : index
    %70 = vector.load %arg7[%c0_29, %c0_30] : memref<16x1xf32, #tpu.memory_space<vmem>>, vector<16x1xf32>
    tpu.vector_store %arg7[%c0_29, %c0_30], %69 {strides = array<i32>} : memref<16x1xf32, #tpu.memory_space<vmem>>, vector<16x1xf32>,
    %c0_i32_31 = arith.constant 0 : i32
    %71 = arith.cmpi eq, %arg1, %c0_i32_31 : i32
    %72 = arith.extui %71 : i1 to i32
    %c0_i32_32 = arith.constant 0 : i32
    %73 = arith.cmpi ne, %72, %c0_i32_32 : i32
    scf.if %73 {
      %c0_33 = arith.constant 0 : index
      %c0_34 = arith.constant 0 : index
      %74 = vector.load %arg6[%c0_33, %c0_34] : memref<16x1xf32, #tpu.memory_space<vmem>>, vector<16x1xf32>
      %75 = vector.shape_cast %74 : vector<16x1xf32> to vector<1x16x1xf32>
      %cst_35 = arith.constant dense<0.000000e+00> : vector<1xf32>
      %76 = vector.multi_reduction <add>, %75, %cst_35 [1, 2] : vector<1x16x1xf32> to vector<1xf32>
      %77 = vector.shape_cast %76 : vector<1xf32> to vector<1x1x1xf32>
      %78 = vector.extract %77[0, 0, 0] : f32 from vector<1x1x1xf32>
      %c0_36 = arith.constant 0 : index
      %c0_37 = arith.constant 0 : index
      %79 = vector.load %arg7[%c0_36, %c0_37] : memref<16x1xf32, #tpu.memory_space<vmem>>, vector<16x1xf32>
      %80 = vector.shape_cast %79 : vector<16x1xf32> to vector<1x16x1xf32>
      %cst_38 = arith.constant dense<0.000000e+00> : vector<1xf32>
      %81 = vector.multi_reduction <add>, %80, %cst_38 [1, 2] : vector<1x16x1xf32> to vector<1xf32>
      %82 = vector.shape_cast %81 : vector<1xf32> to vector<1x1x1xf32>
      %83 = vector.extract %82[0, 0, 0] : f32 from vector<1x1x1xf32>
      %84 = tpu.iota {dimensions = array<i32: 2>} : vector<1x8x128xi32>
      %c0_i32_39 = arith.constant 0 : i32
      %85 = vector.broadcast %c0_i32_39 : i32 to vector<1x8x128xi32>
      %86 = arith.cmpi eq, %84, %85 : vector<1x8x128xi32>
      %c1_i32 = arith.constant 1 : i32
      %87 = vector.broadcast %c1_i32 : i32 to vector<1x8x128xi32>
      %88 = arith.cmpi eq, %84, %87 : vector<1x8x128xi32>
      %cst_40 = arith.constant 0.000000e+00 : f32
      %89 = vector.broadcast %83 : f32 to vector<1x8x128xf32>
      %90 = vector.broadcast %cst_40 : f32 to vector<1x8x128xf32>
      %91 = arith.select %88, %89, %90 : vector<1x8x128xi1>, vector<1x8x128xf32>
      %92 = vector.broadcast %78 : f32 to vector<1x8x128xf32>
      %93 = arith.select %86, %92, %91 : vector<1x8x128xi1>, vector<1x8x128xf32>
      %c0_41 = arith.constant 0 : index
      %c0_42 = arith.constant 0 : index
      %c0_43 = arith.constant 0 : index
      %94 = vector.load %arg5[%c0_41, %c0_42, %c0_43] : memref<1x8x128xf32, #tpu.memory_space<vmem>>, vector<1x8x128xf32>
      tpu.vector_store %arg5[%c0_41, %c0_42, %c0_43], %93 {strides = array<i32>} : memref<1x8x128xf32, #tpu.memory_space<vmem>>, vector<1x8x128xf32>,
    } else {
    }
    return
  }
  func.func @transform_0(%arg0: i32, %arg1: i32) -> (i32, i32, i32) {
    %c0_i32 = arith.constant 0 : i32
    %c0_i32_0 = arith.constant 0 : i32
    return %arg0, %arg1, %c0_i32 : i32, i32, i32
  }
  func.func @transform_1(%arg0: i32, %arg1: i32) -> (i32, i32, i32) {
    %c0_i32 = arith.constant 0 : i32
    %c0_i32_0 = arith.constant 0 : i32
    return %arg0, %arg1, %c0_i32 : i32, i32, i32
  }
  func.func @transform_2(%arg0: i32, %arg1: i32) -> (i32, i32, i32) {
    %c0_i32 = arith.constant 0 : i32
    %c0_i32_0 = arith.constant 0 : i32
    return %arg0, %arg1, %c0_i32 : i32, i32, i32
  }
  func.func @transform_3(%arg0: i32, %arg1: i32) -> (i32, i32, i32) {
    %c0_i32 = arith.constant 0 : i32
    %c0_i32_0 = arith.constant 0 : i32
    %c0_i32_1 = arith.constant 0 : i32
    return %arg0, %c0_i32, %c0_i32_0 : i32, i32, i32
  }
}

module attributes {stable_mosaic.version = 11 : i64} {
  func.func @_box_loss_kernel(%arg0: i32, %arg1: memref<8x4xf32, #tpu.memory_space<vmem>>, %arg2: memref<8x4xf32, #tpu.memory_space<vmem>>, %arg3: memref<2xf32, #tpu.memory_space<smem>>) attributes {dimension_semantics = [#tpu.dimension_semantics<arbitrary>], iteration_bounds = array<i64: 1>, scalar_prefetch = 0 : i64, scratch_operands = 0 : i64, tpu.core_type = #tpu.core_type<tc>, window_params = [{pipeline_mode = #tpu.pipeline_mode<synchronous>, transform_indices = @transform_0, window_bounds = array<i64: 8, 4>}, {pipeline_mode = #tpu.pipeline_mode<synchronous>, transform_indices = @transform_1, window_bounds = array<i64: 8, 4>}, {transform_indices = @transform_2, window_bounds = array<i64: 2>}]} {
    %c0 = arith.constant 0 : index
    %c0_0 = arith.constant 0 : index
    %0 = vector.load %arg1[%c0, %c0_0] : memref<8x4xf32, #tpu.memory_space<vmem>>, vector<8x4xf32>
    %c0_1 = arith.constant 0 : index
    %c0_2 = arith.constant 0 : index
    %1 = vector.load %arg2[%c0_1, %c0_2] : memref<8x4xf32, #tpu.memory_space<vmem>>, vector<8x4xf32>
    %2 = arith.subf %0, %1 : vector<8x4xf32>
    %3 = math.absf %2 : vector<8x4xf32>
    %4 = vector.shape_cast %3 : vector<8x4xf32> to vector<1x8x4xf32>
    %cst = arith.constant dense<0.000000e+00> : vector<1xf32>
    %5 = vector.multi_reduction <add>, %4, %cst [1, 2] : vector<1x8x4xf32> to vector<1xf32>
    %6 = vector.shape_cast %5 : vector<1xf32> to vector<1x1x1xf32>
    %7 = vector.extract %6[0, 0, 0] : f32 from vector<1x1x1xf32>
    %8 = vector.extract_strided_slice %0 {offsets = [0, 0], sizes = [8, 1], strides = [1, 1]} : vector<8x4xf32> to vector<8x1xf32>
    %9 = vector.extract_strided_slice %0 {offsets = [0, 1], sizes = [8, 1], strides = [1, 1]} : vector<8x4xf32> to vector<8x1xf32>
    %10 = vector.extract_strided_slice %0 {offsets = [0, 2], sizes = [8, 1], strides = [1, 1]} : vector<8x4xf32> to vector<8x1xf32>
    %11 = vector.extract_strided_slice %0 {offsets = [0, 3], sizes = [8, 1], strides = [1, 1]} : vector<8x4xf32> to vector<8x1xf32>
    %cst_3 = arith.constant 5.000000e-01 : f32
    %12 = vector.broadcast %cst_3 : f32 to vector<8x1xf32>
    %13 = arith.mulf %12, %10 : vector<8x1xf32>
    %14 = arith.subf %8, %13 : vector<8x1xf32>
    %cst_4 = arith.constant 5.000000e-01 : f32
    %15 = vector.broadcast %cst_4 : f32 to vector<8x1xf32>
    %16 = arith.mulf %15, %11 : vector<8x1xf32>
    %17 = arith.subf %9, %16 : vector<8x1xf32>
    %cst_5 = arith.constant 5.000000e-01 : f32
    %18 = vector.broadcast %cst_5 : f32 to vector<8x1xf32>
    %19 = arith.mulf %18, %10 : vector<8x1xf32>
    %20 = arith.addf %8, %19 : vector<8x1xf32>
    %cst_6 = arith.constant 5.000000e-01 : f32
    %21 = vector.broadcast %cst_6 : f32 to vector<8x1xf32>
    %22 = arith.mulf %21, %11 : vector<8x1xf32>
    %23 = arith.addf %9, %22 : vector<8x1xf32>
    %24 = vector.extract_strided_slice %1 {offsets = [0, 0], sizes = [8, 1], strides = [1, 1]} : vector<8x4xf32> to vector<8x1xf32>
    %25 = vector.extract_strided_slice %1 {offsets = [0, 1], sizes = [8, 1], strides = [1, 1]} : vector<8x4xf32> to vector<8x1xf32>
    %26 = vector.extract_strided_slice %1 {offsets = [0, 2], sizes = [8, 1], strides = [1, 1]} : vector<8x4xf32> to vector<8x1xf32>
    %27 = vector.extract_strided_slice %1 {offsets = [0, 3], sizes = [8, 1], strides = [1, 1]} : vector<8x4xf32> to vector<8x1xf32>
    %cst_7 = arith.constant 5.000000e-01 : f32
    %28 = vector.broadcast %cst_7 : f32 to vector<8x1xf32>
    %29 = arith.mulf %28, %26 : vector<8x1xf32>
    %30 = arith.subf %24, %29 : vector<8x1xf32>
    %cst_8 = arith.constant 5.000000e-01 : f32
    %31 = vector.broadcast %cst_8 : f32 to vector<8x1xf32>
    %32 = arith.mulf %31, %27 : vector<8x1xf32>
    %33 = arith.subf %25, %32 : vector<8x1xf32>
    %cst_9 = arith.constant 5.000000e-01 : f32
    %34 = vector.broadcast %cst_9 : f32 to vector<8x1xf32>
    %35 = arith.mulf %34, %26 : vector<8x1xf32>
    %36 = arith.addf %24, %35 : vector<8x1xf32>
    %cst_10 = arith.constant 5.000000e-01 : f32
    %37 = vector.broadcast %cst_10 : f32 to vector<8x1xf32>
    %38 = arith.mulf %37, %27 : vector<8x1xf32>
    %39 = arith.addf %25, %38 : vector<8x1xf32>
    %40 = arith.subf %20, %14 : vector<8x1xf32>
    %41 = arith.subf %23, %17 : vector<8x1xf32>
    %42 = arith.mulf %40, %41 : vector<8x1xf32>
    %43 = arith.subf %36, %30 : vector<8x1xf32>
    %44 = arith.subf %39, %33 : vector<8x1xf32>
    %45 = arith.mulf %43, %44 : vector<8x1xf32>
    %46 = arith.minimumf %20, %36 : vector<8x1xf32>
    %47 = arith.maximumf %14, %30 : vector<8x1xf32>
    %48 = arith.subf %46, %47 : vector<8x1xf32>
    %cst_11 = arith.constant 0.000000e+00 : f32
    %49 = vector.broadcast %cst_11 : f32 to vector<8x1xf32>
    %50 = arith.maximumf %48, %49 : vector<8x1xf32>
    %51 = arith.minimumf %23, %39 : vector<8x1xf32>
    %52 = arith.maximumf %17, %33 : vector<8x1xf32>
    %53 = arith.subf %51, %52 : vector<8x1xf32>
    %cst_12 = arith.constant 0.000000e+00 : f32
    %54 = vector.broadcast %cst_12 : f32 to vector<8x1xf32>
    %55 = arith.maximumf %53, %54 : vector<8x1xf32>
    %56 = arith.mulf %50, %55 : vector<8x1xf32>
    %57 = arith.addf %42, %45 : vector<8x1xf32>
    %58 = arith.subf %57, %56 : vector<8x1xf32>
    %59 = arith.divf %56, %58 : vector<8x1xf32>
    %60 = arith.maximumf %20, %36 : vector<8x1xf32>
    %61 = arith.minimumf %14, %30 : vector<8x1xf32>
    %62 = arith.subf %60, %61 : vector<8x1xf32>
    %63 = arith.maximumf %23, %39 : vector<8x1xf32>
    %64 = arith.minimumf %17, %33 : vector<8x1xf32>
    %65 = arith.subf %63, %64 : vector<8x1xf32>
    %66 = arith.mulf %62, %65 : vector<8x1xf32>
    %67 = arith.subf %66, %58 : vector<8x1xf32>
    %68 = arith.divf %67, %66 : vector<8x1xf32>
    %69 = arith.subf %59, %68 : vector<8x1xf32>
    %c0_13 = arith.constant 0 : index
    %70 = memref.load %arg3[%c0_13] : memref<2xf32, #tpu.memory_space<smem>>
    memref.store %7, %arg3[%c0_13] : memref<2xf32, #tpu.memory_space<smem>>
    %cst_14 = arith.constant 1.000000e+00 : f32
    %71 = vector.broadcast %cst_14 : f32 to vector<8x1xf32>
    %72 = arith.subf %71, %69 : vector<8x1xf32>
    %73 = vector.shape_cast %72 : vector<8x1xf32> to vector<1x8x1xf32>
    %cst_15 = arith.constant dense<0.000000e+00> : vector<1xf32>
    %74 = vector.multi_reduction <add>, %73, %cst_15 [1, 2] : vector<1x8x1xf32> to vector<1xf32>
    %75 = vector.shape_cast %74 : vector<1xf32> to vector<1x1x1xf32>
    %76 = vector.extract %75[0, 0, 0] : f32 from vector<1x1x1xf32>
    %c1 = arith.constant 1 : index
    %77 = memref.load %arg3[%c1] : memref<2xf32, #tpu.memory_space<smem>>
    memref.store %76, %arg3[%c1] : memref<2xf32, #tpu.memory_space<smem>>
    return
  }
  func.func @transform_0(%arg0: i32) -> (i32, i32) {
    %c0_i32 = arith.constant 0 : i32
    %c0_i32_0 = arith.constant 0 : i32
    %c0_i32_1 = arith.constant 0 : i32
    return %c0_i32, %c0_i32_0 : i32, i32
  }
  func.func @transform_1(%arg0: i32) -> (i32, i32) {
    %c0_i32 = arith.constant 0 : i32
    %c0_i32_0 = arith.constant 0 : i32
    %c0_i32_1 = arith.constant 0 : i32
    return %c0_i32, %c0_i32_0 : i32, i32
  }
  func.func @transform_2(%arg0: i32) -> i32 {
    %c0_i32 = arith.constant 0 : i32
    %c0_i32_0 = arith.constant 0 : i32
    return %c0_i32 : i32
  }
}

</mosaic_0001>

<llo_original>
// kernel: decola_criterion_losses.3
$region0: #{decola_criterion_losses.3}
  #allocation0 [shape = 'u32[]', space=smem, size = 0x4, offset = 0x4, fixed_abs, tag = 'smem constant byte address 0x4 - core index']
  #allocation1 [shape = 'u32[144,128]{1,0:T(1,128)}', space=vmem, size = 0x12000, scoped, tag = 'internal scratch']
  %s0 = inlined_call_operand.vmem [shape: f32[8,4], index: 0, kind: input, shape index: {}]
  %s1 = inlined_call_operand.vmem [shape: f32[8,4], index: 1, kind: input, shape index: {}]
  %s2 = inlined_call_operand.vmem [shape: f32[2], index: 2, kind: output, shape index: {}]
  %s3 = sld [smem:[#allocation0]]
  $region18: #{decola_criterion_losses.3} parent=0
    _
  %s5 = ssub.s32 1, %s3
  %s6 = scalar_select 0, %s5, %s3
  $region1: #{decola_criterion_losses.3} parent=0
    #allocation2 [shape = 'u8[512]{0}', space=smem, size = 0x200, scoped, tag = 'output window, operand 0, single buffered']
    #allocation3 [shape = 's32[1]{0}', space=sflag, size = 0x4, scoped, tag = 'scoped memory for decola_criterion_losses.3']
    %7 = vsyncpa [#allocation3], 0
    // Predicated region
    $region2: #{decola_criterion_losses.3} parent=1 // pred_check
      _
    $region3: #{decola_criterion_losses.3} parent=1 // pred_check_branch
      %9 = sbr.rel (0) target = $region5
    $region4: #{decola_criterion_losses.3} parent=1 // pred_region
      _
    $region5: #{decola_criterion_losses.3} parent=1 // pred_fallthru
      _
    // Predicated region
    $region6: #{decola_criterion_losses.3} parent=1 // pred_check
      _
    $region7: #{decola_criterion_losses.3} parent=1 // pred_check_branch
      %11 = sbr.rel (0) target = $region9
    $region8: #{decola_criterion_losses.3} parent=1 // pred_region
      _
    $region9: #{decola_criterion_losses.3} parent=1 // pred_fallthru
      _
    %v12 = vld [vmem:[%s0] sm:$0xff]
    %v13 = vld [vmem:[%s1] sm:$0xff]
    %v14 = vsub.f32 %v12, %v13
    %v15 = vand.u32 2147483647, %v14
    %vm16 = vcmask 31744
    %v17 = vsel %vm16, %v15, 0.0
    %18 = vadd.xlane.f32.xlu0 %v17
    %v19 = vpop.xlane.xlu0 %18
    %v20 = vrot.slane %v19, 4
    %v21 = vadd.f32 %v19, %v20
    %v22 = vrot.slane %v21, 2
    %v23 = vadd.f32 %v21, %v22
    %v24 = vrot.slane %v23, 1
    %v25 = vadd.f32 %v23, %v24
    %s26 = vtos %v25
    %v27 = vmul.f32 %v12, 0.5
    %29 = vrot.lane.b32.xlu0 %v27, 126
    %v30 = vpop.permute.xlu0 %29
    %v32 = vsub.f32 %v12, %v30
    %v33 = vadd.f32 %v12, %v30
    %v34 = vmul.f32 %v13, 0.5
    %36 = vrot.lane.b32.xlu0 %v34, 126
    %v37 = vpop.permute.xlu0 %36
    %v39 = vsub.f32 %v13, %v37
    %v40 = vadd.f32 %v13, %v37
    %v41 = vsub.f32 %v33, %v32
    %43 = vrot.lane.b32.xlu0 %v41, 127
    %v44 = vpop.permute.xlu0 %43
    %v46 = vmul.f32 %v41, %v44
    %v47 = vsub.f32 %v40, %v39
    %49 = vrot.lane.b32.xlu0 %v47, 127
    %v50 = vpop.permute.xlu0 %49
    %v52 = vmul.f32 %v47, %v50
    %v53 = vmin.f32 %v33, %v40
    %v54 = vmax.f32 %v32, %v39
    %v55 = vsub.f32 %v53, %v54
    %v56 = vmax.f32 %v55, 0.0
    %58 = vrot.lane.b32.xlu0 %v56, 127
    %v59 = vpop.permute.xlu0 %58
    %v61 = vmul.f32 %v56, %v59
    %v62 = vadd.f32 %v46, %v52
    %v63 = vsub.f32 %v62, %v61
    %v64 = vrcp.pop %v63
    %v65 = vmul.f32 %v61, %v64
    %v66 = vmax.f32 %v33, %v40
    %v67 = vmin.f32 %v32, %v39
    %v68 = vsub.f32 %v66, %v67
    %70 = vrot.lane.b32.xlu0 %v68, 127
    %v71 = vpop.permute.xlu0 %70
    %v73 = vmul.f32 %v68, %v71
    %v74 = vsub.f32 %v73, %v63
    %v75 = vrcp.pop %v73
    %v76 = vmul.f32 %v74, %v75
    %v77 = vsub.f32 %v65, %v76
    %s78 = scalar_lea.smem [#allocation2], 0
    %79 = sst [smem:[%s78]] %s26
    %v80 = vsub.f32 1.0, %v77
    %vm81 = vcmask 7168
    %v82 = vsel %vm81, %v80, 0.0
    %83 = vadd.xlane.f32.xlu0 %v82
    %v84 = vpop.xlane.xlu0 %83
    %v85 = vrot.slane %v84, 4
    %v86 = vadd.f32 %v84, %v85
    %v87 = vrot.slane %v86, 2
    %v88 = vadd.f32 %v86, %v87
    %v89 = vrot.slane %v88, 1
    %v90 = vadd.f32 %v88, %v89
    %s91 = vtos %v90
    %s92 = scalar_lea.smem [#allocation2], 1
    %93 = sst [smem:[%s92]] %s91
    // Predicated region
    $region10: #{decola_criterion_losses.3} parent=1 // pred_check
      _
    $region11: #{decola_criterion_losses.3} parent=1 // pred_check_branch
      %95 = sbr.rel (0) target = $region13
    $region12: #{decola_criterion_losses.3} parent=1 // pred_region
      %s97 = ssub.s32 16, 16
      %98 = vsyncadd [#allocation3], %s97
      %s100 = sshll.u32 %s2, 4
      %s101 = int_to_ptr.vmem [resolvable:$true] %s100
      %103 = dma.smem_to_vmem [#allocation2], 16, %s101, [#allocation3]
    $region13: #{decola_criterion_losses.3} parent=1 // pred_fallthru
      _
    // Predicated region
    $region14: #{decola_criterion_losses.3} parent=1 // pred_check
      _
    $region15: #{decola_criterion_losses.3} parent=1 // pred_check_branch
      %105 = sbr.rel (0) target = $region17
    $region16: #{decola_criterion_losses.3} parent=1 // pred_region
      %106 = dma.done [#allocation3], 16
    $region17: #{decola_criterion_losses.3} parent=1 // pred_fallthru
      _
    %107 = sfence
    %108 = vsyncpa [#allocation3], 1

// kernel: decola_criterion_losses.2
$region0: #{decola_criterion_losses.2}
  #allocation0 [shape = 'u32[]', space=smem, size = 0x4, offset = 0x4, fixed_abs, tag = 'smem constant byte address 0x4 - core index']
  #allocation1 [shape = 'u32[144,128]{1,0:T(1,128)}', space=vmem, size = 0x12000, scoped, tag = 'internal scratch']
  #allocation2 [shape = 'f32[16,1]{1,0:T(8,128)}', space=vmem, size = 0x2000, scoped, tag = 'scratch operand']
  #allocation3 [shape = 'f32[16,1]{1,0:T(8,128)}', space=vmem, size = 0x2000, scoped, tag = 'scratch operand']
  %s0 = inlined_call_operand.vmem [shape: f32[2,16,1], index: 0, kind: input, shape index: {}]
  %s1 = inlined_call_operand.vmem [shape: f32[2,16,8], index: 1, kind: input, shape index: {}]
  %s2 = inlined_call_operand.vmem [shape: f32[2,16,8], index: 2, kind: input, shape index: {}]
  %s3 = inlined_call_operand.vmem [shape: f32[2,8,128], index: 3, kind: output, shape index: {}]
  %s4 = sld [smem:[#allocation0]]
  $region53: #{decola_criterion_losses.2} parent=0
    _
  %s6 = ssub.s32 1, %s4
  %s7 = scalar_select 0, %s6, %s4
  loop: start=0, step=1, limit=4
  $region2: #{decola_criterion_losses.2} parent=0 // loop_pre_header
    _
  $region3: #{decola_criterion_losses.2} parent=0 // loop_header
    %s9 = sphi 0, %s13
    %p10 = scmp.ge.s32.totalorder %s9, 4
    %s16 = sphi 0, %s28
    %s17 = sphi 0, %s24
    %s18 = sphi 0, %s16
    %s19 = sphi 0, %s17
    %s20 = sphi 0, %s18
    %s21 = sphi 0, %s19
    %s33 = sphi 0, %s35
    %s36 = sphi 0, %s33
    %s37 = sphi 0, %s36
    %s53 = sphi 0, %s37
    %s61 = sphi 0, %s63
    %s64 = sphi 0, %s61
    %s65 = sphi 0, %s64
    %s81 = sphi 0, %s65
    %s89 = sphi 0, %s91
    %s92 = sphi 0, %s89
    %s93 = sphi 0, %s92
    %s109 = sphi 0, %s93
    %s115 = sphi 0, %s117
    %s118 = sphi 0, %s115
    %s119 = sphi 0, %s118
    %s135 = sphi 0, %s119
  $region4: #{decola_criterion_losses.2} parent=0 // loop_header_branch
    %12 = sbr.rel (%p10) target = $region8
  $region5: #{decola_criterion_losses.2} parent=0 // loop_body
    %s14 = ssub.s32 %s9, 1
    %s15 = ssub.s32 %s9, 2
    %s22 = sadd.s32 1, %s17
    %p23 = scmp.ge.s32.totalorder %s22, 1
    %s24 = scalar_select %p23, 0, %s22
    %s25 = sadd.s32 1, %s16
    %s26 = scalar_select %p23, %s25, %s16
    %p27 = scmp.ge.s32.totalorder %s26, 2
    %s28 = scalar_select %p27, 0, %s26
    %s29 = ssub.s32 %s16, %s28
    %s30 = ssub.s32 %s17, %s24
    %s31 = sor.u32 %s29, %s30
    %p32 = scmp.eq.s32.totalorder %s31, 0
    %s34 = sadd.s32 %s33, 1
    %s35 = scalar_select %p32, %s33, %s34
    %p38 = pneg %p32
    %p39 = scmp.eq.s32.totalorder %s9, 1
    %p40 = por %p38, %p39
    %p41 = scmp.ne.s32.totalorder %s33, %s36
    %p42 = scmp.eq.s32.totalorder %s9, 0
    %p43 = por %p41, %p42
    %p44 = scmp.ne.s32.totalorder %s33, %s36
    %p45 = scmp.eq.s32.totalorder %s14, 1
    %p46 = por %p44, %p45
    %p47 = scmp.ne.s32.totalorder %s36, %s37
    %p48 = scmp.eq.s32.totalorder %s14, 0
    %p49 = por %p47, %p48
    %p50 = scmp.ne.s32.totalorder %s36, %s37
    %p51 = scmp.eq.s32.totalorder %s15, 1
    %p52 = por %p50, %p51
    %p54 = scmp.ne.s32.totalorder %s37, %s53
    %p55 = scmp.eq.s32.totalorder %s15, 0
    %p56 = por %p54, %p55
    %s57 = ssub.s32 %s16, %s28
    %s58 = ssub.s32 %s17, %s24
    %s59 = sor.u32 %s57, %s58
    %p60 = scmp.eq.s32.totalorder %s59, 0
    %s62 = sadd.s32 %s61, 1
    %s63 = scalar_select %p60, %s61, %s62
    %p66 = pneg %p60
    %p67 = scmp.eq.s32.totalorder %s9, 1
    %p68 = por %p66, %p67
    %p69 = scmp.ne.s32.totalorder %s61, %s64
    %p70 = scmp.eq.s32.totalorder %s9, 0
    %p71 = por %p69, %p70
    %p72 = scmp.ne.s32.totalorder %s61, %s64
    %p73 = scmp.eq.s32.totalorder %s14, 1
    %p74 = por %p72, %p73
    %p75 = scmp.ne.s32.totalorder %s64, %s65
    %p76 = scmp.eq.s32.totalorder %s14, 0
    %p77 = por %p75, %p76
    %p78 = scmp.ne.s32.totalorder %s64, %s65
    %p79 = scmp.eq.s32.totalorder %s15, 1
    %p80 = por %p78, %p79
    %p82 = scmp.ne.s32.totalorder %s65, %s81
    %p83 = scmp.eq.s32.totalorder %s15, 0
    %p84 = por %p82, %p83
    %s85 = ssub.s32 %s16, %s28
    %s86 = ssub.s32 %s17, %s24
    %s87 = sor.u32 %s85, %s86
    %p88 = scmp.eq.s32.totalorder %s87, 0
    %s90 = sadd.s32 %s89, 1
    %s91 = scalar_select %p88, %s89, %s90
    %p94 = pneg %p88
    %p95 = scmp.eq.s32.totalorder %s9, 1
    %p96 = por %p94, %p95
    %p97 = scmp.ne.s32.totalorder %s89, %s92
    %p98 = scmp.eq.s32.totalorder %s9, 0
    %p99 = por %p97, %p98
    %p100 = scmp.ne.s32.totalorder %s89, %s92
    %p101 = scmp.eq.s32.totalorder %s14, 1
    %p102 = por %p100, %p101
    %p103 = scmp.ne.s32.totalorder %s92, %s93
    %p104 = scmp.eq.s32.totalorder %s14, 0
    %p105 = por %p103, %p104
    %p106 = scmp.ne.s32.totalorder %s92, %s93
    %p107 = scmp.eq.s32.totalorder %s15, 1
    %p108 = por %p106, %p107
    %p110 = scmp.ne.s32.totalorder %s93, %s109
    %p111 = scmp.eq.s32.totalorder %s15, 0
    %p112 = por %p110, %p111
    %s113 = ssub.s32 %s16, %s28
    %p114 = scmp.eq.s32.totalorder %s113, 0
    %s116 = sadd.s32 %s115, 1
    %s117 = scalar_select %p114, %s115, %s116
    %p120 = pneg %p114
    %p121 = scmp.eq.s32.totalorder %s9, 1
    %p122 = por %p120, %p121
    %p123 = scmp.ne.s32.totalorder %s115, %s118
    %p124 = scmp.eq.s32.totalorder %s9, 0
    %p125 = por %p123, %p124
    %p126 = scmp.ne.s32.totalorder %s115, %s118
    %p127 = scmp.eq.s32.totalorder %s14, 1
    %p128 = por %p126, %p127
    %p129 = scmp.ne.s32.totalorder %s118, %s119
    %p130 = scmp.eq.s32.totalorder %s14, 0
    %p131 = por %p129, %p130
    %p132 = scmp.ne.s32.totalorder %s118, %s119
    %p133 = scmp.eq.s32.totalorder %s15, 1
    %p134 = por %p132, %p133
    %p136 = scmp.ne.s32.totalorder %s119, %s135
    %p137 = scmp.eq.s32.totalorder %s15, 0
    %p138 = por %p136, %p137
    %p139 = scmp.le.s32.totalorder 1, %s9
    %p140 = scmp.lt.s32.totalorder %s9, 3
    %p141 = pnand %p139, %p140
    %p142 = pneg %p141
    // Predicated region
    $region9: #{decola_criterion_losses.2} parent=5 // pred_check
      _
    $region10: #{decola_criterion_losses.2} parent=5 // pred_check_branch
      %144 = sbr.rel (%p141) target = $region12
    $region11: #{decola_criterion_losses.2} parent=5 // pred_region
      %s145 = ssub.s32 %s9, 1
    $region12: #{decola_criterion_losses.2} parent=5 // pred_fallthru
      _
    %p146 = scmp.lt.s32.totalorder %s9, 2
    // Predicated region
    $region13: #{decola_criterion_losses.2} parent=5 // pred_check
      %p147 = pneg %p146
    $region14: #{decola_criterion_losses.2} parent=5 // pred_check_branch
      %149 = sbr.rel (%p147) target = $region16
    $region15: #{decola_criterion_losses.2} parent=5 // pred_region
      // Predicated region
      $region17: #{decola_criterion_losses.2} parent=15 // pred_check
        %p150 = pneg %p43
      $region18: #{decola_criterion_losses.2} parent=15 // pred_check_branch
        %152 = sbr.rel (%p150) target = $region20
      $region19: #{decola_criterion_losses.2} parent=15 // pred_region
        %s153 = smul.u32 2, %s17
        %p154 = scmp.lt.s32.totalorder %s16, 1
        %s155 = scalar_select %p154, %s16, 1
        %p156 = scmp.lt.s32.totalorder %s153, 1
        %s157 = scalar_select %p156, %s153, 1
        %s158 = smul.addr %s155, 2
        %s159 = sadd.s32 %s157, %s158
        %s160 = smul.addr %s159, 8
        %s161 = scalar_lea.vmem %s0, %s160
        %s162 = smul.u32 2, %s17
      $region20: #{decola_criterion_losses.2} parent=15 // pred_fallthru
        _
      // Predicated region
      $region21: #{decola_criterion_losses.2} parent=15 // pred_check
        %p163 = pneg %p71
      $region22: #{decola_criterion_losses.2} parent=15 // pred_check_branch
        %165 = sbr.rel (%p163) target = $region24
      $region23: #{decola_criterion_losses.2} parent=15 // pred_region
        %s166 = smul.u32 2, %s17
        %p167 = scmp.lt.s32.totalorder %s16, 1
        %s168 = scalar_select %p167, %s16, 1
        %p169 = scmp.lt.s32.totalorder %s166, 1
        %s170 = scalar_select %p169, %s166, 1
        %s171 = smul.addr %s168, 2
        %s172 = sadd.s32 %s170, %s171
        %s173 = smul.addr %s172, 8
        %s174 = scalar_lea.vmem %s1, %s173
        %s175 = smul.u32 2, %s17
      $region24: #{decola_criterion_losses.2} parent=15 // pred_fallthru
        _
      // Predicated region
      $region25: #{decola_criterion_losses.2} parent=15 // pred_check
        %p176 = pneg %p99
      $region26: #{decola_criterion_losses.2} parent=15 // pred_check_branch
        %178 = sbr.rel (%p176) target = $region28
      $region27: #{decola_criterion_losses.2} parent=15 // pred_region
        %s179 = smul.u32 2, %s17
        %p180 = scmp.lt.s32.totalorder %s16, 1
        %s181 = scalar_select %p180, %s16, 1
        %p182 = scmp.lt.s32.totalorder %s179, 1
        %s183 = scalar_select %p182, %s179, 1
        %s184 = smul.addr %s181, 2
        %s185 = sadd.s32 %s183, %s184
        %s186 = smul.addr %s185, 8
        %s187 = scalar_lea.vmem %s2, %s186
        %s188 = smul.u32 2, %s17
      $region28: #{decola_criterion_losses.2} parent=15 // pred_fallthru
        _
    $region16: #{decola_criterion_losses.2} parent=5 // pred_fallthru
      _
    %p189 = scmp.le.s32.totalorder 1, %s9
    %p190 = scmp.lt.s32.totalorder %s9, 3
    %p191 = pnand %p189, %p190
    %p192 = pneg %p191
    // Predicated region
    $region29: #{decola_criterion_losses.2} parent=5 // pred_check
      _
    $region30: #{decola_criterion_losses.2} parent=5 // pred_check_branch
      %194 = sbr.rel (%p191) target = $region32
    $region31: #{decola_criterion_losses.2} parent=5 // pred_region
      %s195 = ssub.s32 %s9, 1
      %s196 = smul.u32 2, %s19
      %p197 = scmp.lt.s32.totalorder %s18, 1
      %s198 = scalar_select %p197, %s18, 1
      %p199 = scmp.lt.s32.totalorder %s196, 1
      %s200 = scalar_select %p199, %s196, 1
      %s201 = smul.addr %s198, 2
      %s202 = sadd.s32 %s200, %s201
      %s203 = smul.addr %s202, 8
      %s204 = scalar_lea.vmem %s0, %s203
      %p205 = pneg %p49
      %p206 = pneg %p46
      %s207 = smul.u32 2, %s19
      %p208 = scmp.lt.s32.totalorder %s18, 1
      %s209 = scalar_select %p208, %s18, 1
      %p210 = scmp.lt.s32.totalorder %s207, 1
      %s211 = scalar_select %p210, %s207, 1
      %s212 = smul.addr %s209, 2
      %s213 = sadd.s32 %s211, %s212
      %s214 = smul.addr %s213, 8
      %s215 = scalar_lea.vmem %s1, %s214
      %p216 = pneg %p77
      %p217 = pneg %p74
      %s218 = smul.u32 2, %s19
      %p219 = scmp.lt.s32.totalorder %s18, 1
      %s220 = scalar_select %p219, %s18, 1
      %p221 = scmp.lt.s32.totalorder %s218, 1
      %s222 = scalar_select %p221, %s218, 1
      %s223 = smul.addr %s220, 2
      %s224 = sadd.s32 %s222, %s223
      %s225 = smul.addr %s224, 8
      %s226 = scalar_lea.vmem %s2, %s225
      %p227 = pneg %p105
      %p228 = pneg %p102
      %p229 = pneg %p131
      %p230 = pneg %p128
      %p231 = scmp.lt.s32.totalorder %s18, 1
      %s232 = scalar_select %p231, %s18, 1
      %s233 = smul.addr %s232, 8
      %s234 = scalar_lea.vmem %s3, %s233
      %s235 = smul.u32 2, %s19
      %p236 = scmp.lt.s32.totalorder %s18, 1
      %s237 = scalar_select %p236, %s18, 1
      %p238 = scmp.lt.s32.totalorder %s235, 1
      %s239 = scalar_select %p238, %s235, 1
      %s240 = smul.addr %s237, 2
      %s241 = sadd.s32 %s239, %s240
      %s242 = smul.addr %s241, 8
      %s243 = scalar_lea.vmem %s0, %s242
      %s244 = smul.u32 2, %s19
      %s245 = smul.u32 2, %s19
      %p246 = scmp.lt.s32.totalorder %s18, 1
      %s247 = scalar_select %p246, %s18, 1
      %p248 = scmp.lt.s32.totalorder %s245, 1
      %s249 = scalar_select %p248, %s245, 1
      %s250 = smul.addr %s247, 2
      %s251 = sadd.s32 %s249, %s250
      %s252 = smul.addr %s251, 8
      %s253 = scalar_lea.vmem %s1, %s252
      %s254 = smul.u32 2, %s19
      %s255 = smul.u32 2, %s19
      %p256 = scmp.lt.s32.totalorder %s18, 1
      %s257 = scalar_select %p256, %s18, 1
      %p258 = scmp.lt.s32.totalorder %s255, 1
      %s259 = scalar_select %p258, %s255, 1
      %s260 = smul.addr %s257, 2
      %s261 = sadd.s32 %s259, %s260
      %s262 = smul.addr %s261, 8
      %s263 = scalar_lea.vmem %s2, %s262
      %s264 = smul.u32 2, %s19
      %p265 = scmp.lt.s32.totalorder %s18, 1
      %s266 = scalar_select %p265, %s18, 1
      %s267 = smul.addr %s266, 8
      %s268 = scalar_lea.vmem %s3, %s267
      %p269 = scmp.eq.s32.totalorder %s19, 0
      // Predicated region
      $region33: #{decola_criterion_losses.2} parent=31 // pred_check
        %p270 = pneg %p269
      $region34: #{decola_criterion_losses.2} parent=31 // pred_check_branch
        %272 = sbr.rel (%p270) target = $region36
      $region35: #{decola_criterion_losses.2} parent=31 // pred_region
        %vm273 = vcmask 7168
        %274 = vst.msk [vmem:[#allocation2] sm:$0xff] %vm273, 0.0
        %275 = vst.msk [vmem:[#allocation2 + $0x8] sm:$0xff] %vm273, 0.0
        %276 = vst.msk [vmem:[#allocation3] sm:$0xff] %vm273, 0.0
        %277 = vst.msk [vmem:[#allocation3 + $0x8] sm:$0xff] %vm273, 0.0
      $region36: #{decola_criterion_losses.2} parent=31 // pred_fallthru
        _
      %v278 = vlaneseq
      %v279 = vshrl.u32 %v278, 7
      %v280 = vadd.s32 %v279, 8
      %s281 = smul.u32 %s19, 16
      %v282 = vstv %s281
      %v283 = vadd.s32 %v279, %v282
      %v284 = vadd.s32 %v280, %v282
      %vm285 = vcmp.lt.s32.totalorder %v283, 16
      %vm286 = vcmp.lt.s32.totalorder %v284, 16
      %v287 = vld [vmem:[%s253] sm:$0xff]
      %v288 = vld [vmem:[%s253 + $0x8] sm:$0xff]
      %v289 = vand.u32 2147483647, %v287
      %v290 = vand.u32 2147483647, %v288
      %v291 = vsub.f32 0.0, %v289
      %v292 = vsub.f32 0.0, %v290
      %v293 = vmul.f32 %v291, 1.442695
      %v294 = vpow.pop %v293
      %v295 = vmul.f32 %v292, 1.442695
      %v296 = vpow.pop %v295
      %v297 = vadd.f32 %v294, 1.0
      %v298 = vadd.f32 %v296, 1.0
      %v299 = vlog2.pop %v297
      %v300 = vmul.f32 %v299, 0.6931472
      %v301 = vlog2.pop %v298
      %v302 = vmul.f32 %v301, 0.6931472
      %v303 = vrcp.pop %v297
      %v304 = vrcp.pop %v298
      %vm305 = vcmp.ge.f32.partialorder %v287, 0.0
      %vm306 = vcmp.ge.f32.partialorder %v288, 0.0
      %v307 = vmul.f32 %v294, %v303
      %v308 = vmul.f32 %v296, %v304
      %v309 = vsel %vm305, %v303, %v307
      %v310 = vsel %vm306, %v304, %v308
      %v311 = vmax.f32 %v287, 0.0
      %v312 = vmax.f32 %v288, 0.0
      %v313 = vadd.f32 %v311, %v300
      %v314 = vadd.f32 %v312, %v302
      %v315 = vsub.f32 %v313, %v287
      %v316 = vsub.f32 %v314, %v288
      %v317 = vmul.f32 %v309, %v309
      %v318 = vmul.f32 %v310, %v310
      %v319 = vmul.f32 %v313, %v317
      %v320 = vmul.f32 %v314, %v318
      %v321 = vmul.f32 %v319, 0.75
      %v322 = vmul.f32 %v320, 0.75
      %v323 = vsub.f32 1.0, %v309
      %v324 = vsub.f32 1.0, %v310
      %v325 = vmul.f32 %v323, %v323
      %v326 = vmul.f32 %v324, %v324
      %v327 = vmul.f32 %v315, %v325
      %v328 = vmul.f32 %v316, %v326
      %v329 = vmul.f32 %v327, 0.25
      %v330 = vmul.f32 %v328, 0.25
      %vm331 = vcmask 64512
      %v332 = vsel %vm331, %v321, 0.0
      %333 = vadd.xlane.f32.xlu0 %v332
      %v334 = vpop.xlane.xlu0 %333
      %v335 = vsel %vm331, %v322, 0.0
      %336 = vadd.xlane.f32.xlu0 %v335
      %v337 = vpop.xlane.xlu0 %336
      %v338 = vsel %vm331, %v329, 0.0
      %339 = vadd.xlane.f32.xlu0 %v338
      %v340 = vpop.xlane.xlu0 %339
      %v341 = vsel %vm331, %v330, 0.0
      %342 = vadd.xlane.f32.xlu0 %v341
      %v343 = vpop.xlane.xlu0 %342
      %v344 = vld [vmem:[%s243] sm:$0xff]
      %v345 = vld [vmem:[%s243 + $0x8] sm:$0xff]
      %v346 = vsub.f32 %v340, %v334
      %v347 = vsub.f32 %v343, %v337
      %v348 = vmul.f32 %v344, %v346
      %v349 = vmul.f32 %v345, %v347
      %v350 = vadd.f32 %v334, %v348
      %v351 = vadd.f32 %v337, %v349
      %v352 = vld [vmem:[#allocation2] sm:$0xff]
      %v353 = vld [vmem:[#allocation2 + $0x8] sm:$0xff]
      %v354 = vsel %vm285, %v350, 0.0
      %v355 = vsel %vm286, %v351, 0.0
      %v356 = vadd.f32 %v352, %v354
      %v357 = vadd.f32 %v353, %v355
      %vm358 = vcmask 7168
      %359 = vst.msk [vmem:[#allocation2] sm:$0xff] %vm358, %v356
      %360 = vst.msk [vmem:[#allocation2 + $0x8] sm:$0xff] %vm358, %v357
      %v361 = vld [vmem:[%s263] sm:$0xff]
      %v362 = vld [vmem:[%s263 + $0x8] sm:$0xff]
      %v363 = vlaneseq
      %v364 = vand.u32 %v363, 127
      %vm365 = vcmp.lt.s32.totalorder %v364, 7
      %v366 = vsel %vm365, %v361, -inf
      %v367 = vsel %vm365, %v362, -inf
      %v368 = vsel %vm331, %v366, -inf
      %369 = vmax.xlane.f32.xlu0 %v368
      %v370 = vpop.xlane.xlu0 %369
      %v371 = vsel %vm331, %v367, -inf
      %372 = vmax.xlane.f32.xlu0 %v371
      %v373 = vpop.xlane.xlu0 %372
      %vm374 = vcmp.ge.f32.partialorder %v370, %v361
      %vm375 = vcmp.ge.f32.partialorder %v373, %v362
      %v376 = vsel %vm374, 1, 0
      %v377 = vsel %vm375, 1, 0
      %v378 = vcvt.s32.f32 %v376
      %v379 = vcvt.s32.f32 %v377
      %v380 = vld [vmem:[#allocation3] sm:$0xff]
      %v381 = vld [vmem:[#allocation3 + $0x8] sm:$0xff]
      %v382 = vsel %vm285, %v378, 0.0
      %v383 = vsel %vm286, %v379, 0.0
      %386 = vrot.lane.b32.xlu0 %v382, 121
      %v387 = vpop.permute.xlu0 %386
      %388 = vrot.lane.b32.xlu0 %v383, 121
      %v389 = vpop.permute.xlu0 %388
      %v392 = vadd.f32 %v380, %v387
      %v393 = vadd.f32 %v381, %v389
      %394 = vst.msk [vmem:[#allocation3] sm:$0xff] %vm358, %v392
      %395 = vst.msk [vmem:[#allocation3 + $0x8] sm:$0xff] %vm358, %v393
      // Predicated region
      $region37: #{decola_criterion_losses.2} parent=31 // pred_check
        %p396 = pneg %p269
      $region38: #{decola_criterion_losses.2} parent=31 // pred_check_branch
        %398 = sbr.rel (%p396) target = $region40
      $region39: #{decola_criterion_losses.2} parent=31 // pred_region
        %v399 = vld [vmem:[#allocation2] sm:$0xff]
        %v400 = vld [vmem:[#allocation2 + $0x8] sm:$0xff]
        %v401 = vsel %vm358, %v399, 0.0
        %v402 = vsel %vm358, %v400, 0.0
        %v403 = vadd.f32 %v401, %v402
        %404 = vadd.xlane.f32.xlu0 %v403
        %v405 = vpop.xlane.xlu0 %404
        %v406 = vrot.slane %v405, 4
        %v407 = vadd.f32 %v405, %v406
        %v408 = vrot.slane %v407, 2
        %v409 = vadd.f32 %v407, %v408
        %v410 = vrot.slane %v409, 1
        %v411 = vadd.f32 %v409, %v410
        %s412 = vtos %v411
        %v413 = vld [vmem:[#allocation3] sm:$0xff]
        %v414 = vld [vmem:[#allocation3 + $0x8] sm:$0xff]
        %v415 = vsel %vm358, %v413, 0.0
        %v416 = vsel %vm358, %v414, 0.0
        %v417 = vadd.f32 %v415, %v416
        %418 = vadd.xlane.f32.xlu0 %v417
        %v419 = vpop.xlane.xlu0 %418
        %v420 = vrot.slane %v419, 4
        %v421 = vadd.f32 %v419, %v420
        %v422 = vrot.slane %v421, 2
        %v423 = vadd.f32 %v421, %v422
        %v424 = vrot.slane %v423, 1
        %v425 = vadd.f32 %v423, %v424
        %s426 = vtos %v425
        %vm427 = vcmp.eq.s32.totalorder %v364, 0
        %vm428 = vcmp.eq.s32.totalorder %v364, 1
        %v429 = vstv %s426
        %v430 = vsel %vm428, %v429, 0.0
        %v431 = vstv %s412
        %v432 = vsel %vm427, %v431, %v430
        %433 = vst [vmem:[%s268] sm:$0xff] %v432
      $region40: #{decola_criterion_losses.2} parent=31 // pred_fallthru
        _
      %p434 = scmp.lt.s32.totalorder %s18, 1
      %s435 = scalar_select %p434, %s18, 1
      %s436 = smul.addr %s435, 8
      %s437 = scalar_lea.vmem %s3, %s436
      // Predicated region
      $region41: #{decola_criterion_losses.2} parent=31 // pred_check
        %p438 = pneg %p128
      $region42: #{decola_criterion_losses.2} parent=31 // pred_check_branch
        %440 = sbr.rel (%p438) target = $region44
      $region43: #{decola_criterion_losses.2} parent=31 // pred_region
        _
      $region44: #{decola_criterion_losses.2} parent=31 // pred_fallthru
        _
    $region32: #{decola_criterion_losses.2} parent=5 // pred_fallthru
      _
    %p441 = scmp.le.s32.totalorder 2, %s9
    // Predicated region
    $region45: #{decola_criterion_losses.2} parent=5 // pred_check
      %p442 = pneg %p441
    $region46: #{decola_criterion_losses.2} parent=5 // pred_check_branch
      %444 = sbr.rel (%p442) target = $region48
    $region47: #{decola_criterion_losses.2} parent=5 // pred_region
      %s445 = ssub.s32 %s9, 2
      // Predicated region
      $region49: #{decola_criterion_losses.2} parent=47 // pred_check
        %p446 = pneg %p134
      $region50: #{decola_criterion_losses.2} parent=47 // pred_check_branch
        %448 = sbr.rel (%p446) target = $region52
      $region51: #{decola_criterion_losses.2} parent=47 // pred_region
        %p449 = scmp.lt.s32.totalorder %s20, 1
        %s450 = scalar_select %p449, %s20, 1
        %s451 = smul.addr %s450, 8
        %s452 = scalar_lea.vmem %s3, %s451
      $region52: #{decola_criterion_losses.2} parent=47 // pred_fallthru
        _
    $region48: #{decola_criterion_losses.2} parent=5 // pred_fallthru
      _
  $region6: #{decola_criterion_losses.2} parent=0 // loop_footer
    %s13 = sadd.s32 1, %s9
  $region7: #{decola_criterion_losses.2} parent=0 // loop_footer_branch
    %8 = sbr.rel target = $region3
  $region8: #{decola_criterion_losses.2} parent=0 // loop_exit
    _

</llo_original>
